<compile_context>
chip_gen: v5e
topology: v5e:2x2
jax: 0.10.0
libtpu: 0.0.40
codegen_flags: <defaults>
</compile_context>

<pallas_src>
import functools

import jax
import jax.numpy as jnp
from jax.experimental import pallas as pl
from jax.experimental.pallas import tpu as pltpu


def conv_relu_stats_kernel(H, W, Wp, x_ref, w_ref, b_ref, m_ref,
                           y_ref, s_ref, ss_ref):
    # x_ref : (1, Cin, Hp*Wp)  padded input, flattened spatial on lanes
    # w_ref : (9, Cout, Cin)   one (Cout, Cin) tap per 3x3 position
    # b_ref : (Cout, 1)
    # m_ref : (1, H*Wp)        1.0 where the flat position is a real pixel
    # y_ref : (1, Cout, H*Wp)  conv+bias+ReLU (garbage in masked columns)
    # s_ref, ss_ref : (1, Cout, 1)  per-sample per-channel sum / sum-of-squares
    HWp = H * Wp
    x = x_ref[0]                                   # (Cin, Hp*Wp)
    cout = w_ref.shape[1]

    acc = jnp.zeros((cout, HWp), jnp.float32)
    for k in range(9):                             # 9 shifted-slice matmuls
        ky, kx = k // 3, k % 3
        off = ky * Wp + kx
        acc = acc + jnp.dot(w_ref[k], x[:, off:off + HWp],
                            preferred_element_type=jnp.float32)
    acc = jnp.maximum(acc + b_ref[...], 0.0)       # bias + ReLU
    y_ref[0] = acc

    am = acc * m_ref[...]                          # zero out wrap-around columns
    s_ref[0] = jnp.sum(am, axis=1, keepdims=True)
    ss_ref[0] = jnp.sum(am * am, axis=1, keepdims=True)


def bn_apply_kernel(W, y_ref, sc_ref, sh_ref, o_ref):
    # y_ref : (1, Cout, H, Wp)   sc/sh : (Cout, 1)   o_ref : (1, Cout, H, W)
    yv = y_ref[0][:, :, :W]                        # drop the 2 garbage columns
    sc = sc_ref[...][:, :, None]                   # (Cout, 1, 1)
    sh = sh_ref[...][:, :, None]
    o_ref[0] = yv * sc + sh


def out_img_forward(x_nchw, w, b, gamma, beta, eps=1e-5):
    N, Cin, H, Wd = x_nchw.shape
    Cout = w.shape[0]
    Wp = Wd + 2          # padded width
    Hp = H + 3           # 1 top + 2 bottom pad rows (extra row keeps the last
                         # tap's shifted slice in-bounds in the flat layout)
    HWp = H * Wp

    # --- glue: one pad + free reshape (no 9x im2col blow-up) ---
    xp = jnp.pad(x_nchw, ((0, 0), (0, 0), (1, 2), (1, 1)))
    xp = xp.reshape(N, Cin, Hp * Wp)
    # tap k = ky*3 + kx  ->  w9[k] = w[:, :, ky, kx]
    w9 = jnp.transpose(w, (2, 3, 0, 1)).reshape(9, Cout, Cin)
    b2 = b.reshape(Cout, 1).astype(jnp.float32)
    mask = ((jnp.arange(HWp) % Wp) < Wd).astype(jnp.float32).reshape(1, HWp)

    cparams = pltpu.CompilerParams(
        dimension_semantics=("parallel",),
        vmem_limit_bytes=64 * 1024 * 1024)   # <= v7x physical; above default scoped

    # --- kernel 1: conv (9 shifted matmuls) + bias + ReLU + channel stats ---
    y, s, ss = pl.pallas_call(
        functools.partial(conv_relu_stats_kernel, H, Wd, Wp),
        out_shape=(jax.ShapeDtypeStruct((N, Cout, HWp), jnp.float32),
                   jax.ShapeDtypeStruct((N, Cout, 1), jnp.float32),
                   jax.ShapeDtypeStruct((N, Cout, 1), jnp.float32)),
        grid_spec=pltpu.PrefetchScalarGridSpec(
            num_scalar_prefetch=0,
            grid=(N,),
            in_specs=[
                pl.BlockSpec((1, Cin, Hp * Wp), lambda n: (n, 0, 0)),
                pl.BlockSpec((9, Cout, Cin), lambda n: (0, 0, 0)),
                pl.BlockSpec((Cout, 1), lambda n: (0, 0)),
                pl.BlockSpec((1, HWp), lambda n: (0, 0)),
            ],
            out_specs=[
                pl.BlockSpec((1, Cout, HWp), lambda n: (n, 0, 0)),
                pl.BlockSpec((1, Cout, 1), lambda n: (n, 0, 0)),
                pl.BlockSpec((1, Cout, 1), lambda n: (n, 0, 0)),
            ]),
        compiler_params=cparams,
    )(xp, w9, b2, mask)

    # --- glue: tiny cross-batch stat reduction -> per-channel scale/shift ---
    count = N * H * Wd
    mean = jnp.sum(s[:, :, 0], axis=0) / count
    var = jnp.sum(ss[:, :, 0], axis=0) / count - mean * mean   # biased var
    scale = gamma / jnp.sqrt(var + eps)
    shift = beta - mean * scale

    # free view: split the contiguous minor dim (no data movement)
    y4 = y.reshape(N, Cout, H, Wp)

    # --- kernel 2: apply BN affine, compact Wp -> W, write final NCHW ---
    out = pl.pallas_call(
        functools.partial(bn_apply_kernel, Wd),
        out_shape=jax.ShapeDtypeStruct((N, Cout, H, Wd), jnp.float32),
        grid_spec=pltpu.PrefetchScalarGridSpec(
            num_scalar_prefetch=0,
            grid=(N,),
            in_specs=[
                pl.BlockSpec((1, Cout, H, Wp), lambda n: (n, 0, 0, 0)),
                pl.BlockSpec((Cout, 1), lambda n: (0, 0)),
                pl.BlockSpec((Cout, 1), lambda n: (0, 0)),
            ],
            out_specs=pl.BlockSpec((1, Cout, H, Wd), lambda n: (n, 0, 0, 0))),
        compiler_params=cparams,
    )(y4, scale.reshape(Cout, 1), shift.reshape(Cout, 1))

    return out


def reference_forward(x, w, b, gamma, beta, eps=1e-5):
    y = jax.lax.conv_general_dilated(
        x, w, window_strides=(1, 1), padding=((1, 1), (1, 1)),
        dimension_numbers=("NCHW", "OIHW", "NCHW"))
    y = y + b.reshape(1, -1, 1, 1)
    y = jnp.maximum(y, 0.0)
    mean = jnp.mean(y, axis=(0, 2, 3), keepdims=True)
    var = jnp.mean((y - mean) ** 2, axis=(0, 2, 3), keepdims=True)
    yn = (y - mean) / jnp.sqrt(var + eps)
    return yn * gamma.reshape(1, -1, 1, 1) + beta.reshape(1, -1, 1, 1)


if __name__ == "__main__":
    N, Cin, Cout, H, W = 2, 4, 8, 16, 16

    key = jax.random.PRNGKey(0)
    kx, kw, kb, kg, kbeta = jax.random.split(key, 5)
    x = jax.random.normal(kx, (N, Cin, H, W), dtype=jnp.float32)
    conv_w = 0.1 * jax.random.normal(kw, (Cout, Cin, 3, 3), dtype=jnp.float32)
    conv_b = 0.1 * jax.random.normal(kb, (Cout,), dtype=jnp.float32)
    gamma = jax.random.uniform(kg, (Cout,), minval=0.5, maxval=1.5, dtype=jnp.float32)
    beta = 0.1 * jax.random.normal(kbeta, (Cout,), dtype=jnp.float32)

    out = jax.block_until_ready(out_img_forward(x, conv_w, conv_b, gamma, beta))

    ref = jax.block_until_ready(reference_forward(x, conv_w, conv_b, gamma, beta))
    assert out.shape == (N, Cout, H, W)
    assert jnp.allclose(out, ref, atol=2e-4, rtol=2e-4), "mismatch vs reference"

    print("KERNEL_OK")
</pallas_src>

<mosaic_0001>
module attributes {stable_mosaic.version = 11 : i64} {
  func.func @conv_relu_stats_kernel(%arg0: i32, %arg1: memref<1x4x342xf32, #tpu.memory_space<vmem>>, %arg2: memref<9x8x4xf32, #tpu.memory_space<vmem>>, %arg3: memref<8x1xf32, #tpu.memory_space<vmem>>, %arg4: memref<1x288xf32, #tpu.memory_space<vmem>>, %arg5: memref<1x8x288xf32, #tpu.memory_space<vmem>>, %arg6: memref<1x8x1xf32, #tpu.memory_space<vmem>>, %arg7: memref<1x8x1xf32, #tpu.memory_space<vmem>>) attributes {dimension_semantics = [#tpu.dimension_semantics<parallel>], iteration_bounds = array<i64: 2>, scalar_prefetch = 0 : i64, scratch_operands = 0 : i64, tpu.core_type = #tpu.core_type<tc>, window_params = [{transform_indices = @transform_0, window_bounds = array<i64: 1, 4, 342>}, {pipeline_mode = #tpu.pipeline_mode<synchronous>, transform_indices = @transform_1, window_bounds = array<i64: 9, 8, 4>}, {pipeline_mode = #tpu.pipeline_mode<synchronous>, transform_indices = @transform_2, window_bounds = array<i64: 8, 1>}, {pipeline_mode = #tpu.pipeline_mode<synchronous>, transform_indices = @transform_3, window_bounds = array<i64: 1, 288>}, {transform_indices = @transform_4, window_bounds = array<i64: 1, 8, 288>}, {transform_indices = @transform_5, window_bounds = array<i64: 1, 8, 1>}, {transform_indices = @transform_6, window_bounds = array<i64: 1, 8, 1>}]} {
    %c0 = arith.constant 0 : index
    %c0_0 = arith.constant 0 : index
    %c0_1 = arith.constant 0 : index
    %0 = vector.load %arg1[%c0, %c0_0, %c0_1] : memref<1x4x342xf32, #tpu.memory_space<vmem>>, vector<1x4x342xf32>
    %1 = vector.shape_cast %0 : vector<1x4x342xf32> to vector<4x342xf32>
    %cst = arith.constant 0.000000e+00 : f32
    %2 = vector.broadcast %cst : f32 to vector<8x288xf32>
    %c0_2 = arith.constant 0 : index
    %c0_3 = arith.constant 0 : index
    %c0_4 = arith.constant 0 : index
    %3 = vector.load %arg2[%c0_2, %c0_3, %c0_4] : memref<9x8x4xf32, #tpu.memory_space<vmem>>, vector<1x8x4xf32>
    %4 = vector.shape_cast %3 : vector<1x8x4xf32> to vector<8x4xf32>
    %5 = vector.extract_strided_slice %1 {offsets = [0, 0], sizes = [4, 288], strides = [1, 1]} : vector<4x342xf32> to vector<4x288xf32>
    %cst_5 = arith.constant dense<0.000000e+00> : vector<8x288xf32>
    %6 = tpu.matmul %4, %5, %cst_5 {dimension_numbers = #tpu.dot_dimension_numbers<[1], [0], [0], [1], [0, 0, 1, 1], [], []>} : vector<8x4xf32>, vector<4x288xf32>, vector<8x288xf32> -> vector<8x288xf32>
    %7 = arith.addf %2, %6 : vector<8x288xf32>
    %c1 = arith.constant 1 : index
    %c0_6 = arith.constant 0 : index
    %c0_7 = arith.constant 0 : index
    %8 = vector.load %arg2[%c1, %c0_6, %c0_7] : memref<9x8x4xf32, #tpu.memory_space<vmem>>, vector<1x8x4xf32>
    %9 = vector.shape_cast %8 : vector<1x8x4xf32> to vector<8x4xf32>
    %10 = vector.extract_strided_slice %1 {offsets = [0, 1], sizes = [4, 288], strides = [1, 1]} : vector<4x342xf32> to vector<4x288xf32>
    %cst_8 = arith.constant dense<0.000000e+00> : vector<8x288xf32>
    %11 = tpu.matmul %9, %10, %cst_8 {dimension_numbers = #tpu.dot_dimension_numbers<[1], [0], [0], [1], [0, 0, 1, 1], [], []>} : vector<8x4xf32>, vector<4x288xf32>, vector<8x288xf32> -> vector<8x288xf32>
    %12 = arith.addf %7, %11 : vector<8x288xf32>
    %c2 = arith.constant 2 : index
    %c0_9 = arith.constant 0 : index
    %c0_10 = arith.constant 0 : index
    %13 = vector.load %arg2[%c2, %c0_9, %c0_10] : memref<9x8x4xf32, #tpu.memory_space<vmem>>, vector<1x8x4xf32>
    %14 = vector.shape_cast %13 : vector<1x8x4xf32> to vector<8x4xf32>
    %15 = vector.extract_strided_slice %1 {offsets = [0, 2], sizes = [4, 288], strides = [1, 1]} : vector<4x342xf32> to vector<4x288xf32>
    %cst_11 = arith.constant dense<0.000000e+00> : vector<8x288xf32>
    %16 = tpu.matmul %14, %15, %cst_11 {dimension_numbers = #tpu.dot_dimension_numbers<[1], [0], [0], [1], [0, 0, 1, 1], [], []>} : vector<8x4xf32>, vector<4x288xf32>, vector<8x288xf32> -> vector<8x288xf32>
    %17 = arith.addf %12, %16 : vector<8x288xf32>
    %c3 = arith.constant 3 : index
    %c0_12 = arith.constant 0 : index
    %c0_13 = arith.constant 0 : index
    %18 = vector.load %arg2[%c3, %c0_12, %c0_13] : memref<9x8x4xf32, #tpu.memory_space<vmem>>, vector<1x8x4xf32>
    %19 = vector.shape_cast %18 : vector<1x8x4xf32> to vector<8x4xf32>
    %20 = vector.extract_strided_slice %1 {offsets = [0, 18], sizes = [4, 288], strides = [1, 1]} : vector<4x342xf32> to vector<4x288xf32>
    %cst_14 = arith.constant dense<0.000000e+00> : vector<8x288xf32>
    %21 = tpu.matmul %19, %20, %cst_14 {dimension_numbers = #tpu.dot_dimension_numbers<[1], [0], [0], [1], [0, 0, 1, 1], [], []>} : vector<8x4xf32>, vector<4x288xf32>, vector<8x288xf32> -> vector<8x288xf32>
    %22 = arith.addf %17, %21 : vector<8x288xf32>
    %c4 = arith.constant 4 : index
    %c0_15 = arith.constant 0 : index
    %c0_16 = arith.constant 0 : index
    %23 = vector.load %arg2[%c4, %c0_15, %c0_16] : memref<9x8x4xf32, #tpu.memory_space<vmem>>, vector<1x8x4xf32>
    %24 = vector.shape_cast %23 : vector<1x8x4xf32> to vector<8x4xf32>
    %25 = vector.extract_strided_slice %1 {offsets = [0, 19], sizes = [4, 288], strides = [1, 1]} : vector<4x342xf32> to vector<4x288xf32>
    %cst_17 = arith.constant dense<0.000000e+00> : vector<8x288xf32>
    %26 = tpu.matmul %24, %25, %cst_17 {dimension_numbers = #tpu.dot_dimension_numbers<[1], [0], [0], [1], [0, 0, 1, 1], [], []>} : vector<8x4xf32>, vector<4x288xf32>, vector<8x288xf32> -> vector<8x288xf32>
    %27 = arith.addf %22, %26 : vector<8x288xf32>
    %c5 = arith.constant 5 : index
    %c0_18 = arith.constant 0 : index
    %c0_19 = arith.constant 0 : index
    %28 = vector.load %arg2[%c5, %c0_18, %c0_19] : memref<9x8x4xf32, #tpu.memory_space<vmem>>, vector<1x8x4xf32>
    %29 = vector.shape_cast %28 : vector<1x8x4xf32> to vector<8x4xf32>
    %30 = vector.extract_strided_slice %1 {offsets = [0, 20], sizes = [4, 288], strides = [1, 1]} : vector<4x342xf32> to vector<4x288xf32>
    %cst_20 = arith.constant dense<0.000000e+00> : vector<8x288xf32>
    %31 = tpu.matmul %29, %30, %cst_20 {dimension_numbers = #tpu.dot_dimension_numbers<[1], [0], [0], [1], [0, 0, 1, 1], [], []>} : vector<8x4xf32>, vector<4x288xf32>, vector<8x288xf32> -> vector<8x288xf32>
    %32 = arith.addf %27, %31 : vector<8x288xf32>
    %c6 = arith.constant 6 : index
    %c0_21 = arith.constant 0 : index
    %c0_22 = arith.constant 0 : index
    %33 = vector.load %arg2[%c6, %c0_21, %c0_22] : memref<9x8x4xf32, #tpu.memory_space<vmem>>, vector<1x8x4xf32>
    %34 = vector.shape_cast %33 : vector<1x8x4xf32> to vector<8x4xf32>
    %35 = vector.extract_strided_slice %1 {offsets = [0, 36], sizes = [4, 288], strides = [1, 1]} : vector<4x342xf32> to vector<4x288xf32>
    %cst_23 = arith.constant dense<0.000000e+00> : vector<8x288xf32>
    %36 = tpu.matmul %34, %35, %cst_23 {dimension_numbers = #tpu.dot_dimension_numbers<[1], [0], [0], [1], [0, 0, 1, 1], [], []>} : vector<8x4xf32>, vector<4x288xf32>, vector<8x288xf32> -> vector<8x288xf32>
    %37 = arith.addf %32, %36 : vector<8x288xf32>
    %c7 = arith.constant 7 : index
    %c0_24 = arith.constant 0 : index
    %c0_25 = arith.constant 0 : index
    %38 = vector.load %arg2[%c7, %c0_24, %c0_25] : memref<9x8x4xf32, #tpu.memory_space<vmem>>, vector<1x8x4xf32>
    %39 = vector.shape_cast %38 : vector<1x8x4xf32> to vector<8x4xf32>
    %40 = vector.extract_strided_slice %1 {offsets = [0, 37], sizes = [4, 288], strides = [1, 1]} : vector<4x342xf32> to vector<4x288xf32>
    %cst_26 = arith.constant dense<0.000000e+00> : vector<8x288xf32>
    %41 = tpu.matmul %39, %40, %cst_26 {dimension_numbers = #tpu.dot_dimension_numbers<[1], [0], [0], [1], [0, 0, 1, 1], [], []>} : vector<8x4xf32>, vector<4x288xf32>, vector<8x288xf32> -> vector<8x288xf32>
    %42 = arith.addf %37, %41 : vector<8x288xf32>
    %c8 = arith.constant 8 : index
    %c0_27 = arith.constant 0 : index
    %c0_28 = arith.constant 0 : index
    %43 = vector.load %arg2[%c8, %c0_27, %c0_28] : memref<9x8x4xf32, #tpu.memory_space<vmem>>, vector<1x8x4xf32>
    %44 = vector.shape_cast %43 : vector<1x8x4xf32> to vector<8x4xf32>
    %45 = vector.extract_strided_slice %1 {offsets = [0, 38], sizes = [4, 288], strides = [1, 1]} : vector<4x342xf32> to vector<4x288xf32>
    %cst_29 = arith.constant dense<0.000000e+00> : vector<8x288xf32>
    %46 = tpu.matmul %44, %45, %cst_29 {dimension_numbers = #tpu.dot_dimension_numbers<[1], [0], [0], [1], [0, 0, 1, 1], [], []>} : vector<8x4xf32>, vector<4x288xf32>, vector<8x288xf32> -> vector<8x288xf32>
    %47 = arith.addf %42, %46 : vector<8x288xf32>
    %c0_30 = arith.constant 0 : index
    %c0_31 = arith.constant 0 : index
    %48 = vector.load %arg3[%c0_30, %c0_31] : memref<8x1xf32, #tpu.memory_space<vmem>>, vector<8x1xf32>
    %49 = vector.broadcast %48 : vector<8x1xf32> to vector<8x288xf32>
    %50 = arith.addf %47, %49 : vector<8x288xf32>
    %cst_32 = arith.constant 0.000000e+00 : f32
    %51 = vector.broadcast %cst_32 : f32 to vector<8x288xf32>
    %52 = arith.maximumf %50, %51 : vector<8x288xf32>
    %c0_33 = arith.constant 0 : index
    %c0_34 = arith.constant 0 : index
    %c0_35 = arith.constant 0 : index
    %53 = vector.load %arg5[%c0_33, %c0_34, %c0_35] : memref<1x8x288xf32, #tpu.memory_space<vmem>>, vector<1x8x288xf32>
    %54 = vector.shape_cast %53 : vector<1x8x288xf32> to vector<8x288xf32>
    %55 = vector.shape_cast %52 : vector<8x288xf32> to vector<1x8x288xf32>
    tpu.vector_store %arg5[%c0_33, %c0_34, %c0_35], %55 {strides = array<i32>} : memref<1x8x288xf32, #tpu.memory_space<vmem>>, vector<1x8x288xf32>,
    %c0_36 = arith.constant 0 : index
    %c0_37 = arith.constant 0 : index
    %56 = vector.load %arg4[%c0_36, %c0_37] : memref<1x288xf32, #tpu.memory_space<vmem>>, vector<1x288xf32>
    %57 = vector.broadcast %56 : vector<1x288xf32> to vector<8x288xf32>
    %58 = arith.mulf %52, %57 : vector<8x288xf32>
    %cst_38 = arith.constant dense<0.000000e+00> : vector<8xf32>
    %59 = vector.multi_reduction <add>, %58, %cst_38 [1] : vector<8x288xf32> to vector<8xf32>
    %60 = vector.shape_cast %59 : vector<8xf32> to vector<8x1xf32>
    %c0_39 = arith.constant 0 : index
    %c0_40 = arith.constant 0 : index
    %c0_41 = arith.constant 0 : index
    %61 = vector.load %arg6[%c0_39, %c0_40, %c0_41] : memref<1x8x1xf32, #tpu.memory_space<vmem>>, vector<1x8x1xf32>
    %62 = vector.shape_cast %61 : vector<1x8x1xf32> to vector<8x1xf32>
    %63 = vector.shape_cast %60 : vector<8x1xf32> to vector<1x8x1xf32>
    tpu.vector_store %arg6[%c0_39, %c0_40, %c0_41], %63 {strides = array<i32>} : memref<1x8x1xf32, #tpu.memory_space<vmem>>, vector<1x8x1xf32>,
    %64 = arith.mulf %58, %58 : vector<8x288xf32>
    %cst_42 = arith.constant dense<0.000000e+00> : vector<8xf32>
    %65 = vector.multi_reduction <add>, %64, %cst_42 [1] : vector<8x288xf32> to vector<8xf32>
    %66 = vector.shape_cast %65 : vector<8xf32> to vector<8x1xf32>
    %c0_43 = arith.constant 0 : index
    %c0_44 = arith.constant 0 : index
    %c0_45 = arith.constant 0 : index
    %67 = vector.load %arg7[%c0_43, %c0_44, %c0_45] : memref<1x8x1xf32, #tpu.memory_space<vmem>>, vector<1x8x1xf32>
    %68 = vector.shape_cast %67 : vector<1x8x1xf32> to vector<8x1xf32>
    %69 = vector.shape_cast %66 : vector<8x1xf32> to vector<1x8x1xf32>
    tpu.vector_store %arg7[%c0_43, %c0_44, %c0_45], %69 {strides = array<i32>} : memref<1x8x1xf32, #tpu.memory_space<vmem>>, vector<1x8x1xf32>,
    return
  }
  func.func @transform_0(%arg0: i32) -> (i32, i32, i32) {
    %c0_i32 = arith.constant 0 : i32
    %c0_i32_0 = arith.constant 0 : i32
    %c0_i32_1 = arith.constant 0 : i32
    return %arg0, %c0_i32, %c0_i32_0 : i32, i32, i32
  }
  func.func @transform_1(%arg0: i32) -> (i32, i32, i32) {
    %c0_i32 = arith.constant 0 : i32
    %c0_i32_0 = arith.constant 0 : i32
    %c0_i32_1 = arith.constant 0 : i32
    %c0_i32_2 = arith.constant 0 : i32
    return %c0_i32, %c0_i32_0, %c0_i32_1 : i32, i32, i32
  }
  func.func @transform_2(%arg0: i32) -> (i32, i32) {
    %c0_i32 = arith.constant 0 : i32
    %c0_i32_0 = arith.constant 0 : i32
    %c0_i32_1 = arith.constant 0 : i32
    return %c0_i32, %c0_i32_0 : i32, i32
  }
  func.func @transform_3(%arg0: i32) -> (i32, i32) {
    %c0_i32 = arith.constant 0 : i32
    %c0_i32_0 = arith.constant 0 : i32
    %c0_i32_1 = arith.constant 0 : i32
    return %c0_i32, %c0_i32_0 : i32, i32
  }
  func.func @transform_4(%arg0: i32) -> (i32, i32, i32) {
    %c0_i32 = arith.constant 0 : i32
    %c0_i32_0 = arith.constant 0 : i32
    %c0_i32_1 = arith.constant 0 : i32
    return %arg0, %c0_i32, %c0_i32_0 : i32, i32, i32
  }
  func.func @transform_5(%arg0: i32) -> (i32, i32, i32) {
    %c0_i32 = arith.constant 0 : i32
    %c0_i32_0 = arith.constant 0 : i32
    %c0_i32_1 = arith.constant 0 : i32
    return %arg0, %c0_i32, %c0_i32_0 : i32, i32, i32
  }
  func.func @transform_6(%arg0: i32) -> (i32, i32, i32) {
    %c0_i32 = arith.constant 0 : i32
    %c0_i32_0 = arith.constant 0 : i32
    %c0_i32_1 = arith.constant 0 : i32
    return %arg0, %c0_i32, %c0_i32_0 : i32, i32, i32
  }
}

</mosaic_0001>

<llo_original>
// kernel: tpu_custom_call.1
$region0: #{tpu_custom_call.1}
  #allocation0 [shape = 'u32[]', space=smem, size = 0x4, offset = 0x4, fixed_abs, tag = 'smem constant byte address 0x4 - core index']
  #allocation1 [shape = 'u32[72,128]{1,0:T(1,128)}', space=vmem, size = 0x9000, scoped, tag = 'internal scratch']
  %s0 = inlined_call_operand.vmem [shape: f32[2,4,342], index: 0, kind: input, shape index: {}]
  %s1 = inlined_call_operand.vmem [shape: f32[9,8,4], index: 1, kind: input, shape index: {}]
  %s2 = inlined_call_operand.vmem [shape: f32[8,1], index: 2, kind: input, shape index: {}]
  %s3 = inlined_call_operand.vmem [shape: f32[1,288], index: 3, kind: input, shape index: {}]
  %s4 = inlined_call_operand.hbm [shape: f32[2,8,288], index: 4, kind: output, shape index: {0}]
  %s5 = inlined_call_operand.vmem [shape: f32[2,8,1], index: 5, kind: output, shape index: {1}]
  %s6 = inlined_call_operand.vmem [shape: f32[2,8,1], index: 6, kind: output, shape index: {2}]
  %7 = xla_tuple %s4, %s5, %s6
  %s8 = sld [smem:[#allocation0]]
  $region65: #{tpu_custom_call.1} parent=0
    _
  %s10 = ssub.s32 1, %s8
  %s11 = scalar_select 0, %s10, %s8
  $region1: #{tpu_custom_call.1} parent=0
    #allocation2 [shape = 'u8[24576]{0}', space=vmem, size = 0x6000, scoped, tag = 'output window, operand 0']
    #allocation3 [shape = 's32[2]{0}', space=sflag, size = 0x8, scoped, tag = 'scoped memory for tpu_custom_call.1']
    %12 = vsyncpa [#allocation3], 0
    %s13 = scalar_lea.sflag [#allocation3], 1
    %14 = vsyncpa %s13, 0
    loop: start=0, step=1, limit=4
    $region2: #{tpu_custom_call.1} parent=1 // loop_pre_header
      _
    $region3: #{tpu_custom_call.1} parent=1 // loop_header
      %s16 = sphi 0, %s20
      %p17 = scmp.ge.s32.totalorder %s16, 4
      %s26 = sphi 0, %s28
      %s29 = sphi 0, %s26
      %s30 = sphi 0, %s29
      %s46 = sphi 0, %s30
      %s50 = sphi 0, %s50
      %s52 = sphi 0, %s50
      %s53 = sphi 0, %s52
      %s67 = sphi 0, %s53
      %s71 = sphi 0, %s71
      %s73 = sphi 0, %s71
      %s74 = sphi 0, %s73
      %s88 = sphi 0, %s74
      %s92 = sphi 0, %s92
      %s94 = sphi 0, %s92
      %s95 = sphi 0, %s94
      %s109 = sphi 0, %s95
      %s115 = sphi 0, %s117
      %s118 = sphi 0, %s115
      %s119 = sphi 0, %s118
      %s135 = sphi 0, %s119
      %s141 = sphi 0, %s143
      %s144 = sphi 0, %s141
      %s145 = sphi 0, %s144
      %s161 = sphi 0, %s145
      %s167 = sphi 0, %s169
      %s170 = sphi 0, %s167
      %s171 = sphi 0, %s170
      %s187 = sphi 0, %s171
    $region4: #{tpu_custom_call.1} parent=1 // loop_header_branch
      %19 = sbr.rel (%p17) target = $region8
    $region5: #{tpu_custom_call.1} parent=1 // loop_body
      %s21 = ssub.s32 %s16, 1
      %s22 = ssub.s32 %s16, 2
      %s23 = sadd.s32 %s16, 1
      %s24 = ssub.s32 %s16, %s23
      %p25 = scmp.eq.s32.totalorder %s24, 0
      %s27 = sadd.s32 %s26, 1
      %s28 = scalar_select %p25, %s26, %s27
      %p31 = pneg %p25
      %p32 = scmp.eq.s32.totalorder %s16, 1
      %p33 = por %p31, %p32
      %p34 = scmp.ne.s32.totalorder %s26, %s29
      %p35 = scmp.eq.s32.totalorder %s16, 0
      %p36 = por %p34, %p35
      %p37 = scmp.ne.s32.totalorder %s26, %s29
      %p38 = scmp.eq.s32.totalorder %s21, 1
      %p39 = por %p37, %p38
      %p40 = scmp.ne.s32.totalorder %s29, %s30
      %p41 = scmp.eq.s32.totalorder %s21, 0
      %p42 = por %p40, %p41
      %p43 = scmp.ne.s32.totalorder %s29, %s30
      %p44 = scmp.eq.s32.totalorder %s22, 1
      %p45 = por %p43, %p44
      %p47 = scmp.ne.s32.totalorder %s30, %s46
      %p48 = scmp.eq.s32.totalorder %s22, 0
      %p49 = por %p47, %p48
      %s51 = sadd.s32 %s50, 1
      %p54 = scmp.eq.s32.totalorder %s16, 1
      %p55 = scmp.ne.s32.totalorder %s50, %s52
      %p56 = scmp.eq.s32.totalorder %s16, 0
      %p57 = por %p55, %p56
      %p58 = scmp.ne.s32.totalorder %s50, %s52
      %p59 = scmp.eq.s32.totalorder %s21, 1
      %p60 = por %p58, %p59
      %p61 = scmp.ne.s32.totalorder %s52, %s53
      %p62 = scmp.eq.s32.totalorder %s21, 0
      %p63 = por %p61, %p62
      %p64 = scmp.ne.s32.totalorder %s52, %s53
      %p65 = scmp.eq.s32.totalorder %s22, 1
      %p66 = por %p64, %p65
      %p68 = scmp.ne.s32.totalorder %s53, %s67
      %p69 = scmp.eq.s32.totalorder %s22, 0
      %p70 = por %p68, %p69
      %s72 = sadd.s32 %s71, 1
      %p75 = scmp.eq.s32.totalorder %s16, 1
      %p76 = scmp.ne.s32.totalorder %s71, %s73
      %p77 = scmp.eq.s32.totalorder %s16, 0
      %p78 = por %p76, %p77
      %p79 = scmp.ne.s32.totalorder %s71, %s73
      %p80 = scmp.eq.s32.totalorder %s21, 1
      %p81 = por %p79, %p80
      %p82 = scmp.ne.s32.totalorder %s73, %s74
      %p83 = scmp.eq.s32.totalorder %s21, 0
      %p84 = por %p82, %p83
      %p85 = scmp.ne.s32.totalorder %s73, %s74
      %p86 = scmp.eq.s32.totalorder %s22, 1
      %p87 = por %p85, %p86
      %p89 = scmp.ne.s32.totalorder %s74, %s88
      %p90 = scmp.eq.s32.totalorder %s22, 0
      %p91 = por %p89, %p90
      %s93 = sadd.s32 %s92, 1
      %p96 = scmp.eq.s32.totalorder %s16, 1
      %p97 = scmp.ne.s32.totalorder %s92, %s94
      %p98 = scmp.eq.s32.totalorder %s16, 0
      %p99 = por %p97, %p98
      %p100 = scmp.ne.s32.totalorder %s92, %s94
      %p101 = scmp.eq.s32.totalorder %s21, 1
      %p102 = por %p100, %p101
      %p103 = scmp.ne.s32.totalorder %s94, %s95
      %p104 = scmp.eq.s32.totalorder %s21, 0
      %p105 = por %p103, %p104
      %p106 = scmp.ne.s32.totalorder %s94, %s95
      %p107 = scmp.eq.s32.totalorder %s22, 1
      %p108 = por %p106, %p107
      %p110 = scmp.ne.s32.totalorder %s95, %s109
      %p111 = scmp.eq.s32.totalorder %s22, 0
      %p112 = por %p110, %p111
      %s113 = ssub.s32 %s16, %s23
      %p114 = scmp.eq.s32.totalorder %s113, 0
      %s116 = sadd.s32 %s115, 1
      %s117 = scalar_select %p114, %s115, %s116
      %p120 = pneg %p114
      %p121 = scmp.eq.s32.totalorder %s16, 1
      %p122 = por %p120, %p121
      %p123 = scmp.ne.s32.totalorder %s115, %s118
      %p124 = scmp.eq.s32.totalorder %s16, 0
      %p125 = por %p123, %p124
      %p126 = scmp.ne.s32.totalorder %s115, %s118
      %p127 = scmp.eq.s32.totalorder %s21, 1
      %p128 = por %p126, %p127
      %p129 = scmp.ne.s32.totalorder %s118, %s119
      %p130 = scmp.eq.s32.totalorder %s21, 0
      %p131 = por %p129, %p130
      %p132 = scmp.ne.s32.totalorder %s118, %s119
      %p133 = scmp.eq.s32.totalorder %s22, 1
      %p134 = por %p132, %p133
      %p136 = scmp.ne.s32.totalorder %s119, %s135
      %p137 = scmp.eq.s32.totalorder %s22, 0
      %p138 = por %p136, %p137
      %s139 = ssub.s32 %s16, %s23
      %p140 = scmp.eq.s32.totalorder %s139, 0
      %s142 = sadd.s32 %s141, 1
      %s143 = scalar_select %p140, %s141, %s142
      %p146 = pneg %p140
      %p147 = scmp.eq.s32.totalorder %s16, 1
      %p148 = por %p146, %p147
      %p149 = scmp.ne.s32.totalorder %s141, %s144
      %p150 = scmp.eq.s32.totalorder %s16, 0
      %p151 = por %p149, %p150
      %p152 = scmp.ne.s32.totalorder %s141, %s144
      %p153 = scmp.eq.s32.totalorder %s21, 1
      %p154 = por %p152, %p153
      %p155 = scmp.ne.s32.totalorder %s144, %s145
      %p156 = scmp.eq.s32.totalorder %s21, 0
      %p157 = por %p155, %p156
      %p158 = scmp.ne.s32.totalorder %s144, %s145
      %p159 = scmp.eq.s32.totalorder %s22, 1
      %p160 = por %p158, %p159
      %p162 = scmp.ne.s32.totalorder %s145, %s161
      %p163 = scmp.eq.s32.totalorder %s22, 0
      %p164 = por %p162, %p163
      %s165 = ssub.s32 %s16, %s23
      %p166 = scmp.eq.s32.totalorder %s165, 0
      %s168 = sadd.s32 %s167, 1
      %s169 = scalar_select %p166, %s167, %s168
      %p172 = pneg %p166
      %p173 = scmp.eq.s32.totalorder %s16, 1
      %p174 = por %p172, %p173
      %p175 = scmp.ne.s32.totalorder %s167, %s170
      %p176 = scmp.eq.s32.totalorder %s16, 0
      %p177 = por %p175, %p176
      %p178 = scmp.ne.s32.totalorder %s167, %s170
      %p179 = scmp.eq.s32.totalorder %s21, 1
      %p180 = por %p178, %p179
      %p181 = scmp.ne.s32.totalorder %s170, %s171
      %p182 = scmp.eq.s32.totalorder %s21, 0
      %p183 = por %p181, %p182
      %p184 = scmp.ne.s32.totalorder %s170, %s171
      %p185 = scmp.eq.s32.totalorder %s22, 1
      %p186 = por %p184, %p185
      %p188 = scmp.ne.s32.totalorder %s171, %s187
      %p189 = scmp.eq.s32.totalorder %s22, 0
      %p190 = por %p188, %p189
      %p191 = scmp.le.s32.totalorder 1, %s16
      %p192 = scmp.lt.s32.totalorder %s16, 3
      %p193 = pnand %p191, %p192
      %p194 = pneg %p193
      // Predicated region
      $region9: #{tpu_custom_call.1} parent=5 // pred_check
        _
      $region10: #{tpu_custom_call.1} parent=5 // pred_check_branch
        %196 = sbr.rel (%p193) target = $region12
      $region11: #{tpu_custom_call.1} parent=5 // pred_region
        %s197 = ssub.s32 %s16, 1
        // Predicated region
        $region13: #{tpu_custom_call.1} parent=11 // pred_check
          %p198 = pneg %p63
        $region14: #{tpu_custom_call.1} parent=11 // pred_check_branch
          %200 = sbr.rel (%p198) target = $region16
        $region15: #{tpu_custom_call.1} parent=11 // pred_region
          _
        $region16: #{tpu_custom_call.1} parent=11 // pred_fallthru
          _
        // Predicated region
        $region17: #{tpu_custom_call.1} parent=11 // pred_check
          %p201 = pneg %p84
        $region18: #{tpu_custom_call.1} parent=11 // pred_check_branch
          %203 = sbr.rel (%p201) target = $region20
        $region19: #{tpu_custom_call.1} parent=11 // pred_region
          _
        $region20: #{tpu_custom_call.1} parent=11 // pred_fallthru
          _
        // Predicated region
        $region21: #{tpu_custom_call.1} parent=11 // pred_check
          %p204 = pneg %p105
        $region22: #{tpu_custom_call.1} parent=11 // pred_check_branch
          %206 = sbr.rel (%p204) target = $region24
        $region23: #{tpu_custom_call.1} parent=11 // pred_region
          _
        $region24: #{tpu_custom_call.1} parent=11 // pred_fallthru
          _
      $region12: #{tpu_custom_call.1} parent=5 // pred_fallthru
        _
      %p207 = scmp.lt.s32.totalorder %s16, 2
      // Predicated region
      $region25: #{tpu_custom_call.1} parent=5 // pred_check
        %p208 = pneg %p207
      $region26: #{tpu_custom_call.1} parent=5 // pred_check_branch
        %210 = sbr.rel (%p208) target = $region28
      $region27: #{tpu_custom_call.1} parent=5 // pred_region
        // Predicated region
        $region29: #{tpu_custom_call.1} parent=27 // pred_check
          %p211 = pneg %p36
        $region30: #{tpu_custom_call.1} parent=27 // pred_check_branch
          %213 = sbr.rel (%p211) target = $region32
        $region31: #{tpu_custom_call.1} parent=27 // pred_region
          %p214 = scmp.lt.s32.totalorder %s16, 1
          %s215 = scalar_select %p214, %s16, 1
          %s216 = smul.addr %s215, 3
          %s217 = smul.addr %s216, 4
          %s218 = scalar_lea.vmem %s0, %s217
        $region32: #{tpu_custom_call.1} parent=27 // pred_fallthru
          _
      $region28: #{tpu_custom_call.1} parent=5 // pred_fallthru
        _
      %p219 = scmp.le.s32.totalorder 1, %s16
      %p220 = scmp.lt.s32.totalorder %s16, 3
      %p221 = pnand %p219, %p220
      %p222 = pneg %p221
      // Predicated region
      $region33: #{tpu_custom_call.1} parent=5 // pred_check
        _
      $region34: #{tpu_custom_call.1} parent=5 // pred_check_branch
        %224 = sbr.rel (%p221) target = $region36
      $region35: #{tpu_custom_call.1} parent=5 // pred_region
        %s225 = ssub.s32 %s16, 1
        %p226 = scmp.lt.s32.totalorder %s21, 1
        %s227 = scalar_select %p226, %s21, 1
        %s228 = smul.addr %s227, 3
        %s229 = smul.addr %s228, 4
        %s230 = scalar_lea.vmem %s0, %s229
        %p231 = pneg %p42
        %p232 = pneg %p39
        %p233 = pneg %p63
        %p234 = pneg %p60
        %p235 = pneg %p84
        %p236 = pneg %p81
        %p237 = pneg %p105
        %p238 = pneg %p102
        %p239 = pneg %p131
        %p240 = pneg %p128
        %s241 = sand.u32 %s118, 1
        %s242 = scalar_lea.sflag [#allocation3], %s241
        %s243 = sand.u32 %s118, 1
        %s244 = smul.addr %s243, 24
        %s245 = scalar_lea.vmem [#allocation2], %s244
        %p246 = pneg %p157
        %p247 = pneg %p154
        %p248 = scmp.lt.s32.totalorder %s21, 1
        %s249 = scalar_select %p248, %s21, 1
        %s250 = smul.addr %s249, 8
        %s251 = scalar_lea.vmem %s5, %s250
        %p252 = pneg %p183
        %p253 = pneg %p180
        %p254 = scmp.lt.s32.totalorder %s21, 1
        %s255 = scalar_select %p254, %s21, 1
        %s256 = smul.addr %s255, 8
        %s257 = scalar_lea.vmem %s6, %s256
        %p258 = scmp.lt.s32.totalorder %s21, 1
        %s259 = scalar_select %p258, %s21, 1
        %s260 = smul.addr %s259, 3
        %s261 = smul.addr %s260, 4
        %s262 = scalar_lea.vmem %s0, %s261
        %p263 = scmp.lt.s32.totalorder %s21, 1
        %s264 = scalar_select %p263, %s21, 1
        %s265 = smul.addr %s264, 8
        %s266 = scalar_lea.vmem %s5, %s265
        %p267 = scmp.lt.s32.totalorder %s21, 1
        %s268 = scalar_select %p267, %s21, 1
        %s269 = smul.addr %s268, 8
        %s270 = scalar_lea.vmem %s6, %s269
        %v271 = vld [vmem:[%s262] sm:$0xff]
        %v272 = vld [vmem:[%s262 + $0x8] sm:$0xf]
        %v273 = vld [vmem:[%s1] sm:$0xff]
        %s274 = scalar_lea.vmem %s1, 8
        %v275 = vld [vmem:[%s274] sm:$0xff]
        %278 = vst [vmem:[#allocation1] ss:$2 sm:$0xff] %v271
        %s279 = scalar_lea.vmem [#allocation1], 16
        %280 = vst [vmem:[%s279] ss:$2 sm:$0xff] %v272
        %v281 = vld.sshfl [vmem:[#allocation1] sm:$0xff pattern:$0x75316420]
        %v282 = vld.sshfl [vmem:[#allocation1 + $0x8] sm:$0xff pattern:$0x75316420]
        %v283 = vld.sshfl [vmem:[#allocation1 + $0x10] sm:$0xff pattern:$0x75316420]
        %284 = vrot.lane.b32.xlu0 %v281, 127
        %v285 = vpop.permute.xlu0 %284
        %286 = vrot.lane.b32.xlu0 %v282, 127
        %v287 = vpop.permute.xlu0 %286
        %288 = vrot.lane.b32.xlu0 %v283, 127
        %v289 = vpop.permute.xlu0 %288
        %vm290 = vcmask 1039360
        %v291 = vsel %vm290, %v285, %v287
        %v292 = vsel %vm290, %v287, %v289
        %vm293 = vcmask 31744
        %v295 = vsel %vm293, %v275, 0
        %vm297 = vcmask 1043456
        %v298 = vsel %vm297, %v291, 0
        %v300 = vsel %vm297, %v292, 0
        %v302 = vsel %vm297, %v289, 0
        %304 = vmatpush.msra.mxu0 0.0
        %305 = vmatpush.msra.mxu0 0.0
        %306 = vmatpush.msra.mxu0 0.0
        %307 = vmatpush.msra.mxu0 0.0
        %308 = vmatpush.msra.mxu0 0.0
        %309 = vmatpush.msra.mxu0 0.0
        %310 = vmatpush.msra.mxu0 0.0
        %311 = vmatpush.msra.mxu0 0.0
        %312 = vmatpush.msra.mxu0 0.0
        %313 = vmatpush.msra.mxu0 0.0
        %314 = vmatpush.msra.mxu0 0.0
        %315 = vmatpush.msra.mxu0 0.0
        %316 = vmatpush.msra.mxu0 0.0
        %317 = vmatpush.msra.mxu0 0.0
        %318 = vmatpush.msra.mxu0 0.0
        %319 = vmatpush.msra.mxu0 %v298
        %320 = vmatmul.f32.gmra.mxu0 %v295
        %v321 = vpop.f32.mrf.mxu0
        %v322 = vadd.f32 0.0, %v321
        %323 = vdwg.mxu0
        %324 = vmatpush.msra.mxu0 0.0
        %325 = vmatpush.msra.mxu0 0.0
        %326 = vmatpush.msra.mxu0 0.0
        %327 = vmatpush.msra.mxu0 0.0
        %328 = vmatpush.msra.mxu0 0.0
        %329 = vmatpush.msra.mxu0 0.0
        %330 = vmatpush.msra.mxu0 0.0
        %331 = vmatpush.msra.mxu0 0.0
        %332 = vmatpush.msra.mxu0 0.0
        %333 = vmatpush.msra.mxu0 0.0
        %334 = vmatpush.msra.mxu0 0.0
        %335 = vmatpush.msra.mxu0 0.0
        %336 = vmatpush.msra.mxu0 0.0
        %337 = vmatpush.msra.mxu0 0.0
        %338 = vmatpush.msra.mxu0 0.0
        %339 = vmatpush.msra.mxu0 %v300
        %340 = vmatmul.f32.gmra.mxu0 %v295
        %v341 = vpop.f32.mrf.mxu0
        %v342 = vadd.f32 0.0, %v341
        %343 = vdwg.mxu0
        %344 = vmatpush.msra.mxu0 0.0
        %345 = vmatpush.msra.mxu0 0.0
        %346 = vmatpush.msra.mxu0 0.0
        %347 = vmatpush.msra.mxu0 0.0
        %348 = vmatpush.msra.mxu0 0.0
        %349 = vmatpush.msra.mxu0 0.0
        %350 = vmatpush.msra.mxu0 0.0
        %351 = vmatpush.msra.mxu0 0.0
        %352 = vmatpush.msra.mxu0 0.0
        %353 = vmatpush.msra.mxu0 0.0
        %354 = vmatpush.msra.mxu0 0.0
        %355 = vmatpush.msra.mxu0 0.0
        %356 = vmatpush.msra.mxu0 0.0
        %357 = vmatpush.msra.mxu0 0.0
        %358 = vmatpush.msra.mxu0 0.0
        %359 = vmatpush.msra.mxu0 %v302
        %360 = vmatmul.f32.gmra.mxu0 %v295
        %v361 = vpop.f32.mrf.mxu0
        %v362 = vadd.f32 0.0, %v361
        %363 = vdwg.mxu0
        %364 = vst [vmem:[#allocation1] ss:$2 sm:$0xff] %v271
        %s365 = scalar_lea.vmem [#allocation1], 16
        %366 = vst [vmem:[%s365] ss:$2 sm:$0xff] %v272
        %v367 = vld.sshfl [vmem:[#allocation1] sm:$0xff pattern:$0x75316420]
        %v368 = vld.sshfl [vmem:[#allocation1 + $0x8] sm:$0xff pattern:$0x75316420]
        %v369 = vld.sshfl [vmem:[#allocation1 + $0x10] sm:$0xff pattern:$0x75316420]
        %v371 = vsel %vm293, %v273, 0
        %v373 = vsel %vm297, %v367, 0
        %v375 = vsel %vm297, %v368, 0
        %v377 = vsel %vm297, %v369, 0
        %379 = vmatpush.msra.mxu0 0.0
        %380 = vmatpush.msra.mxu0 0.0
        %381 = vmatpush.msra.mxu0 0.0
        %382 = vmatpush.msra.mxu0 0.0
        %383 = vmatpush.msra.mxu0 0.0
        %384 = vmatpush.msra.mxu0 0.0
        %385 = vmatpush.msra.mxu0 0.0
        %386 = vmatpush.msra.mxu0 0.0
        %387 = vmatpush.msra.mxu0 0.0
        %388 = vmatpush.msra.mxu0 0.0
        %389 = vmatpush.msra.mxu0 0.0
        %390 = vmatpush.msra.mxu0 0.0
        %391 = vmatpush.msra.mxu0 0.0
        %392 = vmatpush.msra.mxu0 0.0
        %393 = vmatpush.msra.mxu0 0.0
        %394 = vmatpush.msra.mxu0 %v373
        %395 = vmatmul.f32.gmra.mxu0 %v371
        %v396 = vpop.f32.mrf.mxu0
        %v397 = vadd.f32 %v322, %v396
        %398 = vdwg.mxu0
        %399 = vmatpush.msra.mxu0 0.0
        %400 = vmatpush.msra.mxu0 0.0
        %401 = vmatpush.msra.mxu0 0.0
        %402 = vmatpush.msra.mxu0 0.0
        %403 = vmatpush.msra.mxu0 0.0
        %404 = vmatpush.msra.mxu0 0.0
        %405 = vmatpush.msra.mxu0 0.0
        %406 = vmatpush.msra.mxu0 0.0
        %407 = vmatpush.msra.mxu0 0.0
        %408 = vmatpush.msra.mxu0 0.0
        %409 = vmatpush.msra.mxu0 0.0
        %410 = vmatpush.msra.mxu0 0.0
        %411 = vmatpush.msra.mxu0 0.0
        %412 = vmatpush.msra.mxu0 0.0
        %413 = vmatpush.msra.mxu0 0.0
        %414 = vmatpush.msra.mxu0 %v375
        %415 = vmatmul.f32.gmra.mxu0 %v371
        %v416 = vpop.f32.mrf.mxu0
        %v417 = vadd.f32 %v342, %v416
        %418 = vdwg.mxu0
        %419 = vmatpush.msra.mxu0 0.0
        %420 = vmatpush.msra.mxu0 0.0
        %421 = vmatpush.msra.mxu0 0.0
        %422 = vmatpush.msra.mxu0 0.0
        %423 = vmatpush.msra.mxu0 0.0
        %424 = vmatpush.msra.mxu0 0.0
        %425 = vmatpush.msra.mxu0 0.0
        %426 = vmatpush.msra.mxu0 0.0
        %427 = vmatpush.msra.mxu0 0.0
        %428 = vmatpush.msra.mxu0 0.0
        %429 = vmatpush.msra.mxu0 0.0
        %430 = vmatpush.msra.mxu0 0.0
        %431 = vmatpush.msra.mxu0 0.0
        %432 = vmatpush.msra.mxu0 0.0
        %433 = vmatpush.msra.mxu0 0.0
        %434 = vmatpush.msra.mxu0 %v377
        %435 = vmatmul.f32.gmra.mxu0 %v371
        %v436 = vpop.f32.mrf.mxu0
        %v437 = vadd.f32 %v362, %v436
        %438 = vdwg.mxu0
        %s439 = scalar_lea.vmem %s1, 16
        %v440 = vld [vmem:[%s439] sm:$0xff]
        %441 = vst [vmem:[#allocation1] ss:$2 sm:$0xff] %v271
        %s442 = scalar_lea.vmem [#allocation1], 16
        %443 = vst [vmem:[%s442] ss:$2 sm:$0xff] %v272
        %v444 = vld.sshfl [vmem:[#allocation1] sm:$0xff pattern:$0x75316420]
        %v445 = vld.sshfl [vmem:[#allocation1 + $0x8] sm:$0xff pattern:$0x75316420]
        %v446 = vld.sshfl [vmem:[#allocation1 + $0x10] sm:$0xff pattern:$0x75316420]
        %447 = vrot.lane.b32.xlu0 %v444, 126
        %v448 = vpop.permute.xlu0 %447
        %449 = vrot.lane.b32.xlu0 %v445, 126
        %v450 = vpop.permute.xlu0 %449
        %451 = vrot.lane.b32.xlu0 %v446, 126
        %v452 = vpop.permute.xlu0 %451
        %vm453 = vcmask 1031168
        %v454 = vsel %vm453, %v448, %v450
        %v455 = vsel %vm453, %v450, %v452
        %v457 = vsel %vm293, %v440, 0
        %v459 = vsel %vm297, %v454, 0
        %v461 = vsel %vm297, %v455, 0
        %v463 = vsel %vm297, %v452, 0
        %465 = vmatpush.msra.mxu0 0.0
        %466 = vmatpush.msra.mxu0 0.0
        %467 = vmatpush.msra.mxu0 0.0
        %468 = vmatpush.msra.mxu0 0.0
        %469 = vmatpush.msra.mxu0 0.0
        %470 = vmatpush.msra.mxu0 0.0
        %471 = vmatpush.msra.mxu0 0.0
        %472 = vmatpush.msra.mxu0 0.0
        %473 = vmatpush.msra.mxu0 0.0
        %474 = vmatpush.msra.mxu0 0.0
        %475 = vmatpush.msra.mxu0 0.0
        %476 = vmatpush.msra.mxu0 0.0
        %477 = vmatpush.msra.mxu0 0.0
        %478 = vmatpush.msra.mxu0 0.0
        %479 = vmatpush.msra.mxu0 0.0
        %480 = vmatpush.msra.mxu0 %v459
        %481 = vmatmul.f32.gmra.mxu0 %v457
        %v482 = vpop.f32.mrf.mxu0
        %v483 = vadd.f32 0.0, %v482
        %484 = vdwg.mxu0
        %485 = vmatpush.msra.mxu0 0.0
        %486 = vmatpush.msra.mxu0 0.0
        %487 = vmatpush.msra.mxu0 0.0
        %488 = vmatpush.msra.mxu0 0.0
        %489 = vmatpush.msra.mxu0 0.0
        %490 = vmatpush.msra.mxu0 0.0
        %491 = vmatpush.msra.mxu0 0.0
        %492 = vmatpush.msra.mxu0 0.0
        %493 = vmatpush.msra.mxu0 0.0
        %494 = vmatpush.msra.mxu0 0.0
        %495 = vmatpush.msra.mxu0 0.0
        %496 = vmatpush.msra.mxu0 0.0
        %497 = vmatpush.msra.mxu0 0.0
        %498 = vmatpush.msra.mxu0 0.0
        %499 = vmatpush.msra.mxu0 0.0
        %500 = vmatpush.msra.mxu0 %v461
        %501 = vmatmul.f32.gmra.mxu0 %v457
        %v502 = vpop.f32.mrf.mxu0
        %v503 = vadd.f32 0.0, %v502
        %504 = vdwg.mxu0
        %505 = vmatpush.msra.mxu0 0.0
        %506 = vmatpush.msra.mxu0 0.0
        %507 = vmatpush.msra.mxu0 0.0
        %508 = vmatpush.msra.mxu0 0.0
        %509 = vmatpush.msra.mxu0 0.0
        %510 = vmatpush.msra.mxu0 0.0
        %511 = vmatpush.msra.mxu0 0.0
        %512 = vmatpush.msra.mxu0 0.0
        %513 = vmatpush.msra.mxu0 0.0
        %514 = vmatpush.msra.mxu0 0.0
        %515 = vmatpush.msra.mxu0 0.0
        %516 = vmatpush.msra.mxu0 0.0
        %517 = vmatpush.msra.mxu0 0.0
        %518 = vmatpush.msra.mxu0 0.0
        %519 = vmatpush.msra.mxu0 0.0
        %520 = vmatpush.msra.mxu0 %v463
        %521 = vmatmul.f32.gmra.mxu0 %v457
        %v522 = vpop.f32.mrf.mxu0
        %v523 = vadd.f32 0.0, %v522
        %524 = vdwg.mxu0
        %v525 = vadd.f32 %v397, %v483
        %v526 = vadd.f32 %v417, %v503
        %v527 = vadd.f32 %v437, %v523
        %s528 = scalar_lea.vmem %s1, 24
        %v529 = vld [vmem:[%s528] sm:$0xff]
        %530 = vst [vmem:[#allocation1] ss:$2 sm:$0xff] %v271
        %s531 = scalar_lea.vmem [#allocation1], 16
        %532 = vst [vmem:[%s531] ss:$2 sm:$0xff] %v272
        %v533 = vld.sshfl [vmem:[#allocation1] sm:$0xff pattern:$0x75316420]
        %v534 = vld.sshfl [vmem:[#allocation1 + $0x8] sm:$0xff pattern:$0x75316420]
        %v535 = vld.sshfl [vmem:[#allocation1 + $0x10] sm:$0xff pattern:$0x75316420]
        %536 = vrot.lane.b32.xlu0 %v533, 110
        %v537 = vpop.permute.xlu0 %536
        %538 = vrot.lane.b32.xlu0 %v534, 110
        %v539 = vpop.permute.xlu0 %538
        %540 = vrot.lane.b32.xlu0 %v535, 110
        %v541 = vpop.permute.xlu0 %540
        %vm542 = vcmask 900096
        %v543 = vsel %vm542, %v537, %v539
        %v544 = vsel %vm542, %v539, %v541
        %v546 = vsel %vm293, %v529, 0
        %v548 = vsel %vm297, %v543, 0
        %v550 = vsel %vm297, %v544, 0
        %v552 = vsel %vm297, %v541, 0
        %554 = vmatpush.msra.mxu0 0.0
        %555 = vmatpush.msra.mxu0 0.0
        %556 = vmatpush.msra.mxu0 0.0
        %557 = vmatpush.msra.mxu0 0.0
        %558 = vmatpush.msra.mxu0 0.0
        %559 = vmatpush.msra.mxu0 0.0
        %560 = vmatpush.msra.mxu0 0.0
        %561 = vmatpush.msra.mxu0 0.0
        %562 = vmatpush.msra.mxu0 0.0
        %563 = vmatpush.msra.mxu0 0.0
        %564 = vmatpush.msra.mxu0 0.0
        %565 = vmatpush.msra.mxu0 0.0
        %566 = vmatpush.msra.mxu0 0.0
        %567 = vmatpush.msra.mxu0 0.0
        %568 = vmatpush.msra.mxu0 0.0
        %569 = vmatpush.msra.mxu0 %v548
        %570 = vmatmul.f32.gmra.mxu0 %v546
        %v571 = vpop.f32.mrf.mxu0
        %v572 = vadd.f32 0.0, %v571
        %573 = vdwg.mxu0
        %574 = vmatpush.msra.mxu0 0.0
        %575 = vmatpush.msra.mxu0 0.0
        %576 = vmatpush.msra.mxu0 0.0
        %577 = vmatpush.msra.mxu0 0.0
        %578 = vmatpush.msra.mxu0 0.0
        %579 = vmatpush.msra.mxu0 0.0
        %580 = vmatpush.msra.mxu0 0.0
        %581 = vmatpush.msra.mxu0 0.0
        %582 = vmatpush.msra.mxu0 0.0
        %583 = vmatpush.msra.mxu0 0.0
        %584 = vmatpush.msra.mxu0 0.0
        %585 = vmatpush.msra.mxu0 0.0
        %586 = vmatpush.msra.mxu0 0.0
        %587 = vmatpush.msra.mxu0 0.0
        %588 = vmatpush.msra.mxu0 0.0
        %589 = vmatpush.msra.mxu0 %v550
        %590 = vmatmul.f32.gmra.mxu0 %v546
        %v591 = vpop.f32.mrf.mxu0
        %v592 = vadd.f32 0.0, %v591
        %593 = vdwg.mxu0
        %594 = vmatpush.msra.mxu0 0.0
        %595 = vmatpush.msra.mxu0 0.0
        %596 = vmatpush.msra.mxu0 0.0
        %597 = vmatpush.msra.mxu0 0.0
        %598 = vmatpush.msra.mxu0 0.0
        %599 = vmatpush.msra.mxu0 0.0
        %600 = vmatpush.msra.mxu0 0.0
        %601 = vmatpush.msra.mxu0 0.0
        %602 = vmatpush.msra.mxu0 0.0
        %603 = vmatpush.msra.mxu0 0.0
        %604 = vmatpush.msra.mxu0 0.0
        %605 = vmatpush.msra.mxu0 0.0
        %606 = vmatpush.msra.mxu0 0.0
        %607 = vmatpush.msra.mxu0 0.0
        %608 = vmatpush.msra.mxu0 0.0
        %609 = vmatpush.msra.mxu0 %v552
        %610 = vmatmul.f32.gmra.mxu0 %v546
        %v611 = vpop.f32.mrf.mxu0
        %v612 = vadd.f32 0.0, %v611
        %613 = vdwg.mxu0
        %v614 = vadd.f32 %v525, %v572
        %v615 = vadd.f32 %v526, %v592
        %v616 = vadd.f32 %v527, %v612
        %s617 = scalar_lea.vmem %s1, 32
        %v618 = vld [vmem:[%s617] sm:$0xff]
        %619 = vst [vmem:[#allocation1] ss:$2 sm:$0xff] %v271
        %s620 = scalar_lea.vmem [#allocation1], 16
        %621 = vst [vmem:[%s620] ss:$2 sm:$0xff] %v272
        %v622 = vld.sshfl [vmem:[#allocation1] sm:$0xff pattern:$0x75316420]
        %v623 = vld.sshfl [vmem:[#allocation1 + $0x8] sm:$0xff pattern:$0x75316420]
        %v624 = vld.sshfl [vmem:[#allocation1 + $0x10] sm:$0xff pattern:$0x75316420]
        %625 = vrot.lane.b32.xlu0 %v622, 109
        %v626 = vpop.permute.xlu0 %625
        %627 = vrot.lane.b32.xlu0 %v623, 109
        %v628 = vpop.permute.xlu0 %627
        %629 = vrot.lane.b32.xlu0 %v624, 109
        %v630 = vpop.permute.xlu0 %629
        %vm631 = vcmask 891904
        %v632 = vsel %vm631, %v626, %v628
        %v633 = vsel %vm631, %v628, %v630
        %v635 = vsel %vm293, %v618, 0
        %v637 = vsel %vm297, %v632, 0
        %v639 = vsel %vm297, %v633, 0
        %v641 = vsel %vm297, %v630, 0
        %643 = vmatpush.msra.mxu0 0.0
        %644 = vmatpush.msra.mxu0 0.0
        %645 = vmatpush.msra.mxu0 0.0
        %646 = vmatpush.msra.mxu0 0.0
        %647 = vmatpush.msra.mxu0 0.0
        %648 = vmatpush.msra.mxu0 0.0
        %649 = vmatpush.msra.mxu0 0.0
        %650 = vmatpush.msra.mxu0 0.0
        %651 = vmatpush.msra.mxu0 0.0
        %652 = vmatpush.msra.mxu0 0.0
        %653 = vmatpush.msra.mxu0 0.0
        %654 = vmatpush.msra.mxu0 0.0
        %655 = vmatpush.msra.mxu0 0.0
        %656 = vmatpush.msra.mxu0 0.0
        %657 = vmatpush.msra.mxu0 0.0
        %658 = vmatpush.msra.mxu0 %v637
        %659 = vmatmul.f32.gmra.mxu0 %v635
        %v660 = vpop.f32.mrf.mxu0
        %v661 = vadd.f32 0.0, %v660
        %662 = vdwg.mxu0
        %663 = vmatpush.msra.mxu0 0.0
        %664 = vmatpush.msra.mxu0 0.0
        %665 = vmatpush.msra.mxu0 0.0
        %666 = vmatpush.msra.mxu0 0.0
        %667 = vmatpush.msra.mxu0 0.0
        %668 = vmatpush.msra.mxu0 0.0
        %669 = vmatpush.msra.mxu0 0.0
        %670 = vmatpush.msra.mxu0 0.0
        %671 = vmatpush.msra.mxu0 0.0
        %672 = vmatpush.msra.mxu0 0.0
        %673 = vmatpush.msra.mxu0 0.0
        %674 = vmatpush.msra.mxu0 0.0
        %675 = vmatpush.msra.mxu0 0.0
        %676 = vmatpush.msra.mxu0 0.0
        %677 = vmatpush.msra.mxu0 0.0
        %678 = vmatpush.msra.mxu0 %v639
        %679 = vmatmul.f32.gmra.mxu0 %v635
        %v680 = vpop.f32.mrf.mxu0
        %v681 = vadd.f32 0.0, %v680
        %682 = vdwg.mxu0
        %683 = vmatpush.msra.mxu0 0.0
        %684 = vmatpush.msra.mxu0 0.0
        %685 = vmatpush.msra.mxu0 0.0
        %686 = vmatpush.msra.mxu0 0.0
        %687 = vmatpush.msra.mxu0 0.0
        %688 = vmatpush.msra.mxu0 0.0
        %689 = vmatpush.msra.mxu0 0.0
        %690 = vmatpush.msra.mxu0 0.0
        %691 = vmatpush.msra.mxu0 0.0
        %692 = vmatpush.msra.mxu0 0.0
        %693 = vmatpush.msra.mxu0 0.0
        %694 = vmatpush.msra.mxu0 0.0
        %695 = vmatpush.msra.mxu0 0.0
        %696 = vmatpush.msra.mxu0 0.0
        %697 = vmatpush.msra.mxu0 0.0
        %698 = vmatpush.msra.mxu0 %v641
        %699 = vmatmul.f32.gmra.mxu0 %v635
        %v700 = vpop.f32.mrf.mxu0
        %v701 = vadd.f32 0.0, %v700
        %702 = vdwg.mxu0
        %v703 = vadd.f32 %v614, %v661
        %v704 = vadd.f32 %v615, %v681
        %v705 = vadd.f32 %v616, %v701
        %s706 = scalar_lea.vmem %s1, 40
        %v707 = vld [vmem:[%s706] sm:$0xff]
        %708 = vst [vmem:[#allocation1] ss:$2 sm:$0xff] %v271
        %s709 = scalar_lea.vmem [#allocation1], 16
        %710 = vst [vmem:[%s709] ss:$2 sm:$0xff] %v272
        %v711 = vld.sshfl [vmem:[#allocation1] sm:$0xff pattern:$0x75316420]
        %v712 = vld.sshfl [vmem:[#allocation1 + $0x8] sm:$0xff pattern:$0x75316420]
        %v713 = vld.sshfl [vmem:[#allocation1 + $0x10] sm:$0xff pattern:$0x75316420]
        %714 = vrot.lane.b32.xlu0 %v711, 108
        %v715 = vpop.permute.xlu0 %714
        %716 = vrot.lane.b32.xlu0 %v712, 108
        %v717 = vpop.permute.xlu0 %716
        %718 = vrot.lane.b32.xlu0 %v713, 108
        %v719 = vpop.permute.xlu0 %718
        %vm720 = vcmask 883712
        %v721 = vsel %vm720, %v715, %v717
        %v722 = vsel %vm720, %v717, %v719
        %v724 = vsel %vm293, %v707, 0
        %v726 = vsel %vm297, %v721, 0
        %v728 = vsel %vm297, %v722, 0
        %v730 = vsel %vm297, %v719, 0
        %732 = vmatpush.msra.mxu0 0.0
        %733 = vmatpush.msra.mxu0 0.0
        %734 = vmatpush.msra.mxu0 0.0
        %735 = vmatpush.msra.mxu0 0.0
        %736 = vmatpush.msra.mxu0 0.0
        %737 = vmatpush.msra.mxu0 0.0
        %738 = vmatpush.msra.mxu0 0.0
        %739 = vmatpush.msra.mxu0 0.0
        %740 = vmatpush.msra.mxu0 0.0
        %741 = vmatpush.msra.mxu0 0.0
        %742 = vmatpush.msra.mxu0 0.0
        %743 = vmatpush.msra.mxu0 0.0
        %744 = vmatpush.msra.mxu0 0.0
        %745 = vmatpush.msra.mxu0 0.0
        %746 = vmatpush.msra.mxu0 0.0
        %747 = vmatpush.msra.mxu0 %v726
        %748 = vmatmul.f32.gmra.mxu0 %v724
        %v749 = vpop.f32.mrf.mxu0
        %v750 = vadd.f32 0.0, %v749
        %751 = vdwg.mxu0
        %752 = vmatpush.msra.mxu0 0.0
        %753 = vmatpush.msra.mxu0 0.0
        %754 = vmatpush.msra.mxu0 0.0
        %755 = vmatpush.msra.mxu0 0.0
        %756 = vmatpush.msra.mxu0 0.0
        %757 = vmatpush.msra.mxu0 0.0
        %758 = vmatpush.msra.mxu0 0.0
        %759 = vmatpush.msra.mxu0 0.0
        %760 = vmatpush.msra.mxu0 0.0
        %761 = vmatpush.msra.mxu0 0.0
        %762 = vmatpush.msra.mxu0 0.0
        %763 = vmatpush.msra.mxu0 0.0
        %764 = vmatpush.msra.mxu0 0.0
        %765 = vmatpush.msra.mxu0 0.0
        %766 = vmatpush.msra.mxu0 0.0
        %767 = vmatpush.msra.mxu0 %v728
        %768 = vmatmul.f32.gmra.mxu0 %v724
        %v769 = vpop.f32.mrf.mxu0
        %v770 = vadd.f32 0.0, %v769
        %771 = vdwg.mxu0
        %772 = vmatpush.msra.mxu0 0.0
        %773 = vmatpush.msra.mxu0 0.0
        %774 = vmatpush.msra.mxu0 0.0
        %775 = vmatpush.msra.mxu0 0.0
        %776 = vmatpush.msra.mxu0 0.0
        %777 = vmatpush.msra.mxu0 0.0
        %778 = vmatpush.msra.mxu0 0.0
        %779 = vmatpush.msra.mxu0 0.0
        %780 = vmatpush.msra.mxu0 0.0
        %781 = vmatpush.msra.mxu0 0.0
        %782 = vmatpush.msra.mxu0 0.0
        %783 = vmatpush.msra.mxu0 0.0
        %784 = vmatpush.msra.mxu0 0.0
        %785 = vmatpush.msra.mxu0 0.0
        %786 = vmatpush.msra.mxu0 0.0
        %787 = vmatpush.msra.mxu0 %v730
        %788 = vmatmul.f32.gmra.mxu0 %v724
        %v789 = vpop.f32.mrf.mxu0
        %v790 = vadd.f32 0.0, %v789
        %791 = vdwg.mxu0
        %v792 = vadd.f32 %v703, %v750
        %v793 = vadd.f32 %v704, %v770
        %v794 = vadd.f32 %v705, %v790
        %s795 = scalar_lea.vmem %s1, 48
        %v796 = vld [vmem:[%s795] sm:$0xff]
        %797 = vst [vmem:[#allocation1] ss:$2 sm:$0xff] %v271
        %s798 = scalar_lea.vmem [#allocation1], 16
        %799 = vst [vmem:[%s798] ss:$2 sm:$0xff] %v272
        %v800 = vld.sshfl [vmem:[#allocation1] sm:$0xff pattern:$0x75316420]
        %v801 = vld.sshfl [vmem:[#allocation1 + $0x8] sm:$0xff pattern:$0x75316420]
        %v802 = vld.sshfl [vmem:[#allocation1 + $0x10] sm:$0xff pattern:$0x75316420]
        %803 = vrot.lane.b32.xlu0 %v800, 92
        %v804 = vpop.permute.xlu0 %803
        %805 = vrot.lane.b32.xlu0 %v801, 92
        %v806 = vpop.permute.xlu0 %805
        %807 = vrot.lane.b32.xlu0 %v802, 92
        %v808 = vpop.permute.xlu0 %807
        %vm809 = vcmask 752640
        %v810 = vsel %vm809, %v804, %v806
        %v811 = vsel %vm809, %v806, %v808
        %v813 = vsel %vm293, %v796, 0
        %v815 = vsel %vm297, %v810, 0
        %v817 = vsel %vm297, %v811, 0
        %v819 = vsel %vm297, %v808, 0
        %821 = vmatpush.msra.mxu0 0.0
        %822 = vmatpush.msra.mxu0 0.0
        %823 = vmatpush.msra.mxu0 0.0
        %824 = vmatpush.msra.mxu0 0.0
        %825 = vmatpush.msra.mxu0 0.0
        %826 = vmatpush.msra.mxu0 0.0
        %827 = vmatpush.msra.mxu0 0.0
        %828 = vmatpush.msra.mxu0 0.0
        %829 = vmatpush.msra.mxu0 0.0
        %830 = vmatpush.msra.mxu0 0.0
        %831 = vmatpush.msra.mxu0 0.0
        %832 = vmatpush.msra.mxu0 0.0
        %833 = vmatpush.msra.mxu0 0.0
        %834 = vmatpush.msra.mxu0 0.0
        %835 = vmatpush.msra.mxu0 0.0
        %836 = vmatpush.msra.mxu0 %v815
        %837 = vmatmul.f32.gmra.mxu0 %v813
        %v838 = vpop.f32.mrf.mxu0
        %v839 = vadd.f32 0.0, %v838
        %840 = vdwg.mxu0
        %841 = vmatpush.msra.mxu0 0.0
        %842 = vmatpush.msra.mxu0 0.0
        %843 = vmatpush.msra.mxu0 0.0
        %844 = vmatpush.msra.mxu0 0.0
        %845 = vmatpush.msra.mxu0 0.0
        %846 = vmatpush.msra.mxu0 0.0
        %847 = vmatpush.msra.mxu0 0.0
        %848 = vmatpush.msra.mxu0 0.0
        %849 = vmatpush.msra.mxu0 0.0
        %850 = vmatpush.msra.mxu0 0.0
        %851 = vmatpush.msra.mxu0 0.0
        %852 = vmatpush.msra.mxu0 0.0
        %853 = vmatpush.msra.mxu0 0.0
        %854 = vmatpush.msra.mxu0 0.0
        %855 = vmatpush.msra.mxu0 0.0
        %856 = vmatpush.msra.mxu0 %v817
        %857 = vmatmul.f32.gmra.mxu0 %v813
        %v858 = vpop.f32.mrf.mxu0
        %v859 = vadd.f32 0.0, %v858
        %860 = vdwg.mxu0
        %861 = vmatpush.msra.mxu0 0.0
        %862 = vmatpush.msra.mxu0 0.0
        %863 = vmatpush.msra.mxu0 0.0
        %864 = vmatpush.msra.mxu0 0.0
        %865 = vmatpush.msra.mxu0 0.0
        %866 = vmatpush.msra.mxu0 0.0
        %867 = vmatpush.msra.mxu0 0.0
        %868 = vmatpush.msra.mxu0 0.0
        %869 = vmatpush.msra.mxu0 0.0
        %870 = vmatpush.msra.mxu0 0.0
        %871 = vmatpush.msra.mxu0 0.0
        %872 = vmatpush.msra.mxu0 0.0
        %873 = vmatpush.msra.mxu0 0.0
        %874 = vmatpush.msra.mxu0 0.0
        %875 = vmatpush.msra.mxu0 0.0
        %876 = vmatpush.msra.mxu0 %v819
        %877 = vmatmul.f32.gmra.mxu0 %v813
        %v878 = vpop.f32.mrf.mxu0
        %v879 = vadd.f32 0.0, %v878
        %880 = vdwg.mxu0
        %v881 = vadd.f32 %v792, %v839
        %v882 = vadd.f32 %v793, %v859
        %v883 = vadd.f32 %v794, %v879
        %s884 = scalar_lea.vmem %s1, 56
        %v885 = vld [vmem:[%s884] sm:$0xff]
        %886 = vst [vmem:[#allocation1] ss:$2 sm:$0xff] %v271
        %s887 = scalar_lea.vmem [#allocation1], 16
        %888 = vst [vmem:[%s887] ss:$2 sm:$0xff] %v272
        %v889 = vld.sshfl [vmem:[#allocation1] sm:$0xff pattern:$0x75316420]
        %v890 = vld.sshfl [vmem:[#allocation1 + $0x8] sm:$0xff pattern:$0x75316420]
        %v891 = vld.sshfl [vmem:[#allocation1 + $0x10] sm:$0xff pattern:$0x75316420]
        %892 = vrot.lane.b32.xlu0 %v889, 91
        %v893 = vpop.permute.xlu0 %892
        %894 = vrot.lane.b32.xlu0 %v890, 91
        %v895 = vpop.permute.xlu0 %894
        %896 = vrot.lane.b32.xlu0 %v891, 91
        %v897 = vpop.permute.xlu0 %896
        %vm898 = vcmask 744448
        %v899 = vsel %vm898, %v893, %v895
        %v900 = vsel %vm898, %v895, %v897
        %v902 = vsel %vm293, %v885, 0
        %v904 = vsel %vm297, %v899, 0
        %v906 = vsel %vm297, %v900, 0
        %v908 = vsel %vm297, %v897, 0
        %910 = vmatpush.msra.mxu0 0.0
        %911 = vmatpush.msra.mxu0 0.0
        %912 = vmatpush.msra.mxu0 0.0
        %913 = vmatpush.msra.mxu0 0.0
        %914 = vmatpush.msra.mxu0 0.0
        %915 = vmatpush.msra.mxu0 0.0
        %916 = vmatpush.msra.mxu0 0.0
        %917 = vmatpush.msra.mxu0 0.0
        %918 = vmatpush.msra.mxu0 0.0
        %919 = vmatpush.msra.mxu0 0.0
        %920 = vmatpush.msra.mxu0 0.0
        %921 = vmatpush.msra.mxu0 0.0
        %922 = vmatpush.msra.mxu0 0.0
        %923 = vmatpush.msra.mxu0 0.0
        %924 = vmatpush.msra.mxu0 0.0
        %925 = vmatpush.msra.mxu0 %v904
        %926 = vmatmul.f32.gmra.mxu0 %v902
        %v927 = vpop.f32.mrf.mxu0
        %v928 = vadd.f32 0.0, %v927
        %929 = vdwg.mxu0
        %930 = vmatpush.msra.mxu0 0.0
        %931 = vmatpush.msra.mxu0 0.0
        %932 = vmatpush.msra.mxu0 0.0
        %933 = vmatpush.msra.mxu0 0.0
        %934 = vmatpush.msra.mxu0 0.0
        %935 = vmatpush.msra.mxu0 0.0
        %936 = vmatpush.msra.mxu0 0.0
        %937 = vmatpush.msra.mxu0 0.0
        %938 = vmatpush.msra.mxu0 0.0
        %939 = vmatpush.msra.mxu0 0.0
        %940 = vmatpush.msra.mxu0 0.0
        %941 = vmatpush.msra.mxu0 0.0
        %942 = vmatpush.msra.mxu0 0.0
        %943 = vmatpush.msra.mxu0 0.0
        %944 = vmatpush.msra.mxu0 0.0
        %945 = vmatpush.msra.mxu0 %v906
        %946 = vmatmul.f32.gmra.mxu0 %v902
        %v947 = vpop.f32.mrf.mxu0
        %v948 = vadd.f32 0.0, %v947
        %949 = vdwg.mxu0
        %950 = vmatpush.msra.mxu0 0.0
        %951 = vmatpush.msra.mxu0 0.0
        %952 = vmatpush.msra.mxu0 0.0
        %953 = vmatpush.msra.mxu0 0.0
        %954 = vmatpush.msra.mxu0 0.0
        %955 = vmatpush.msra.mxu0 0.0
        %956 = vmatpush.msra.mxu0 0.0
        %957 = vmatpush.msra.mxu0 0.0
        %958 = vmatpush.msra.mxu0 0.0
        %959 = vmatpush.msra.mxu0 0.0
        %960 = vmatpush.msra.mxu0 0.0
        %961 = vmatpush.msra.mxu0 0.0
        %962 = vmatpush.msra.mxu0 0.0
        %963 = vmatpush.msra.mxu0 0.0
        %964 = vmatpush.msra.mxu0 0.0
        %965 = vmatpush.msra.mxu0 %v908
        %966 = vmatmul.f32.gmra.mxu0 %v902
        %v967 = vpop.f32.mrf.mxu0
        %v968 = vadd.f32 0.0, %v967
        %969 = vdwg.mxu0
        %v970 = vadd.f32 %v881, %v928
        %v971 = vadd.f32 %v882, %v948
        %v972 = vadd.f32 %v883, %v968
        %s973 = scalar_lea.vmem %s1, 64
        %v974 = vld [vmem:[%s973] sm:$0xff]
        %975 = vst [vmem:[#allocation1] ss:$2 sm:$0xff] %v271
        %s976 = scalar_lea.vmem [#allocation1], 16
        %977 = vst [vmem:[%s976] ss:$2 sm:$0xff] %v272
        %v978 = vld.sshfl [vmem:[#allocation1] sm:$0xff pattern:$0x75316420]
        %v979 = vld.sshfl [vmem:[#allocation1 + $0x8] sm:$0xff pattern:$0x75316420]
        %v980 = vld.sshfl [vmem:[#allocation1 + $0x10] sm:$0xff pattern:$0x75316420]
        %981 = vrot.lane.b32.xlu0 %v978, 90
        %v982 = vpop.permute.xlu0 %981
        %983 = vrot.lane.b32.xlu0 %v979, 90
        %v984 = vpop.permute.xlu0 %983
        %985 = vrot.lane.b32.xlu0 %v980, 90
        %v986 = vpop.permute.xlu0 %985
        %vm987 = vcmask 736256
        %v988 = vsel %vm987, %v982, %v984
        %v989 = vsel %vm987, %v984, %v986
        %v991 = vsel %vm293, %v974, 0
        %v993 = vsel %vm297, %v988, 0
        %v995 = vsel %vm297, %v989, 0
        %v997 = vsel %vm297, %v986, 0
        %999 = vmatpush.msra.mxu0 0.0
        %1000 = vmatpush.msra.mxu0 0.0
        %1001 = vmatpush.msra.mxu0 0.0
        %1002 = vmatpush.msra.mxu0 0.0
        %1003 = vmatpush.msra.mxu0 0.0
        %1004 = vmatpush.msra.mxu0 0.0
        %1005 = vmatpush.msra.mxu0 0.0
        %1006 = vmatpush.msra.mxu0 0.0
        %1007 = vmatpush.msra.mxu0 0.0
        %1008 = vmatpush.msra.mxu0 0.0
        %1009 = vmatpush.msra.mxu0 0.0
        %1010 = vmatpush.msra.mxu0 0.0
        %1011 = vmatpush.msra.mxu0 0.0
        %1012 = vmatpush.msra.mxu0 0.0
        %1013 = vmatpush.msra.mxu0 0.0
        %1014 = vmatpush.msra.mxu0 %v993
        %1015 = vmatmul.f32.gmra.mxu0 %v991
        %v1016 = vpop.f32.mrf.mxu0
        %v1017 = vadd.f32 0.0, %v1016
        %1018 = vdwg.mxu0
        %1019 = vmatpush.msra.mxu0 0.0
        %1020 = vmatpush.msra.mxu0 0.0
        %1021 = vmatpush.msra.mxu0 0.0
        %1022 = vmatpush.msra.mxu0 0.0
        %1023 = vmatpush.msra.mxu0 0.0
        %1024 = vmatpush.msra.mxu0 0.0
        %1025 = vmatpush.msra.mxu0 0.0
        %1026 = vmatpush.msra.mxu0 0.0
        %1027 = vmatpush.msra.mxu0 0.0
        %1028 = vmatpush.msra.mxu0 0.0
        %1029 = vmatpush.msra.mxu0 0.0
        %1030 = vmatpush.msra.mxu0 0.0
        %1031 = vmatpush.msra.mxu0 0.0
        %1032 = vmatpush.msra.mxu0 0.0
        %1033 = vmatpush.msra.mxu0 0.0
        %1034 = vmatpush.msra.mxu0 %v995
        %1035 = vmatmul.f32.gmra.mxu0 %v991
        %v1036 = vpop.f32.mrf.mxu0
        %v1037 = vadd.f32 0.0, %v1036
        %1038 = vdwg.mxu0
        %1039 = vmatpush.msra.mxu0 0.0
        %1040 = vmatpush.msra.mxu0 0.0
        %1041 = vmatpush.msra.mxu0 0.0
        %1042 = vmatpush.msra.mxu0 0.0
        %1043 = vmatpush.msra.mxu0 0.0
        %1044 = vmatpush.msra.mxu0 0.0
        %1045 = vmatpush.msra.mxu0 0.0
        %1046 = vmatpush.msra.mxu0 0.0
        %1047 = vmatpush.msra.mxu0 0.0
        %1048 = vmatpush.msra.mxu0 0.0
        %1049 = vmatpush.msra.mxu0 0.0
        %1050 = vmatpush.msra.mxu0 0.0
        %1051 = vmatpush.msra.mxu0 0.0
        %1052 = vmatpush.msra.mxu0 0.0
        %1053 = vmatpush.msra.mxu0 0.0
        %1054 = vmatpush.msra.mxu0 %v997
        %1055 = vmatmul.f32.gmra.mxu0 %v991
        %v1056 = vpop.f32.mrf.mxu0
        %v1057 = vadd.f32 0.0, %v1056
        %1058 = vdwg.mxu0
        %v1059 = vadd.f32 %v970, %v1017
        %v1060 = vadd.f32 %v971, %v1037
        %v1061 = vadd.f32 %v972, %v1057
        %v1062 = vld [vmem:[%s2] sm:$0xff]
        %1064 = vset.pattern.permute.xlu0 0
        %1065 = vperm.xlu0 %1064, %v1062
        %v1066 = vpop.permute.xlu0 %1065
        %v1068 = vadd.f32 %v1059, %v1066
        %v1069 = vadd.f32 %v1060, %v1066
        %v1070 = vadd.f32 %v1061, %v1066
        %v1071 = vmax.f32 %v1068, 0.0
        %v1072 = vmax.f32 %v1069, 0.0
        %v1073 = vmax.f32 %v1070, 0.0
        %1074 = vst [vmem:[%s245] sm:$0xff] %v1071
        %1075 = vst [vmem:[%s245 + $0x8] sm:$0xff] %v1072
        %vm1076 = vcmask 261120
        %1077 = vst.msk [vmem:[%s245 + $0x10] sm:$0xff] %vm1076, %v1073
        %v1078 = vld [vmem:[%s3] sm:$0x7]
        %v1080 = vperm.slane %v1078, 0
        %v1081 = vperm.slane %v1078, 1
        %v1082 = vperm.slane %v1078, 2
        %v1086 = vmul.f32 %v1071, %v1080
        %v1087 = vmul.f32 %v1072, %v1081
        %v1088 = vmul.f32 %v1073, %v1082
        %v1089 = vadd.f32 %v1086, %v1087
        %v1090 = vsel %vm1076, %v1088, 0.0
        %v1091 = vadd.f32 %v1089, %v1090
        %1092 = vadd.xlane.f32.xlu0 %v1091
        %v1093 = vpop.xlane.xlu0 %1092
        %vm1094 = vcmask 7168
        %1095 = vst.msk [vmem:[%s266] sm:$0xff] %vm1094, %v1093
        %v1096 = vmul.f32 %v1086, %v1086
        %v1097 = vmul.f32 %v1087, %v1087
        %v1098 = vmul.f32 %v1088, %v1088
        %v1099 = vadd.f32 %v1096, %v1097
        %v1100 = vsel %vm1076, %v1098, 0.0
        %v1101 = vadd.f32 %v1099, %v1100
        %1102 = vadd.xlane.f32.xlu0 %v1101
        %v1103 = vpop.xlane.xlu0 %1102
        %1104 = vst.msk [vmem:[%s270] sm:$0xff] %vm1094, %v1103
        %s1105 = sand.u32 %s118, 1
        %s1106 = scalar_lea.sflag [#allocation3], %s1105
        %s1107 = sand.u32 %s118, 1
        %s1108 = smul.addr %s1107, 24
        %s1109 = scalar_lea.vmem [#allocation2], %s1108
        %p1110 = scmp.lt.s32.totalorder %s21, 1
        %s1111 = scalar_select %p1110, %s21, 1
        %s1112 = smul.addr %s1111, 8
        %s1113 = scalar_lea.vmem %s5, %s1112
        %p1114 = scmp.lt.s32.totalorder %s21, 1
        %s1115 = scalar_select %p1114, %s21, 1
        %s1116 = smul.addr %s1115, 8
        %s1117 = scalar_lea.vmem %s6, %s1116
        // Predicated region
        $region37: #{tpu_custom_call.1} parent=35 // pred_check
          %p1118 = pneg %p128
        $region38: #{tpu_custom_call.1} parent=35 // pred_check_branch
          %1120 = sbr.rel (%p1118) target = $region40
        $region39: #{tpu_custom_call.1} parent=35 // pred_region
          %1122 = vsyncadd %s1106, 0
          %s1123 = smul.addr %s21, 3
          %s1124 = smul.addr %s1123, 8
          %s1125 = scalar_lea.hbm %s4, %s1124
          %s1127 = sshll.u32 %s1109, 4
          %s1128 = int_to_ptr.vmem [resolvable:$true] %s1127
          %s1129 = sshll.u32 %s1125, 4
          %s1130 = int_to_ptr.hbm [resolvable:$true] %s1129
          %1132 = dma.vmem_to_hbm [thread:$0]  %s1128, 384, %s1130, %s1106
        $region40: #{tpu_custom_call.1} parent=35 // pred_fallthru
          _
        // Predicated region
        $region41: #{tpu_custom_call.1} parent=35 // pred_check
          %p1133 = pneg %p154
        $region42: #{tpu_custom_call.1} parent=35 // pred_check_branch
          %1135 = sbr.rel (%p1133) target = $region44
        $region43: #{tpu_custom_call.1} parent=35 // pred_region
          _
        $region44: #{tpu_custom_call.1} parent=35 // pred_fallthru
          _
        // Predicated region
        $region45: #{tpu_custom_call.1} parent=35 // pred_check
          %p1136 = pneg %p180
        $region46: #{tpu_custom_call.1} parent=35 // pred_check_branch
          %1138 = sbr.rel (%p1136) target = $region48
        $region47: #{tpu_custom_call.1} parent=35 // pred_region
          _
        $region48: #{tpu_custom_call.1} parent=35 // pred_fallthru
          _
      $region36: #{tpu_custom_call.1} parent=5 // pred_fallthru
        _
      %p1139 = scmp.le.s32.totalorder 2, %s16
      // Predicated region
      $region49: #{tpu_custom_call.1} parent=5 // pred_check
        %p1140 = pneg %p1139
      $region50: #{tpu_custom_call.1} parent=5 // pred_check_branch
        %1142 = sbr.rel (%p1140) target = $region52
      $region51: #{tpu_custom_call.1} parent=5 // pred_region
        %s1143 = ssub.s32 %s16, 2
        // Predicated region
        $region53: #{tpu_custom_call.1} parent=51 // pred_check
          %p1144 = pneg %p134
        $region54: #{tpu_custom_call.1} parent=51 // pred_check_branch
          %1146 = sbr.rel (%p1144) target = $region56
        $region55: #{tpu_custom_call.1} parent=51 // pred_region
          %s1147 = sand.u32 %s119, 1
          %s1148 = scalar_lea.sflag [#allocation3], %s1147
          %s1149 = sand.u32 %s119, 1
          %s1150 = smul.addr %s1149, 24
          %s1151 = scalar_lea.vmem [#allocation2], %s1150
          %1153 = dma.done %s1148, 384
        $region56: #{tpu_custom_call.1} parent=51 // pred_fallthru
          _
        // Predicated region
        $region57: #{tpu_custom_call.1} parent=51 // pred_check
          %p1154 = pneg %p160
        $region58: #{tpu_custom_call.1} parent=51 // pred_check_branch
          %1156 = sbr.rel (%p1154) target = $region60
        $region59: #{tpu_custom_call.1} parent=51 // pred_region
          %p1157 = scmp.lt.s32.totalorder %s22, 1
          %s1158 = scalar_select %p1157, %s22, 1
          %s1159 = smul.addr %s1158, 8
          %s1160 = scalar_lea.vmem %s5, %s1159
        $region60: #{tpu_custom_call.1} parent=51 // pred_fallthru
          _
        // Predicated region
        $region61: #{tpu_custom_call.1} parent=51 // pred_check
          %p1161 = pneg %p186
        $region62: #{tpu_custom_call.1} parent=51 // pred_check_branch
          %1163 = sbr.rel (%p1161) target = $region64
        $region63: #{tpu_custom_call.1} parent=51 // pred_region
          %p1164 = scmp.lt.s32.totalorder %s22, 1
          %s1165 = scalar_select %p1164, %s22, 1
          %s1166 = smul.addr %s1165, 8
          %s1167 = scalar_lea.vmem %s6, %s1166
        $region64: #{tpu_custom_call.1} parent=51 // pred_fallthru
          _
      $region52: #{tpu_custom_call.1} parent=5 // pred_fallthru
        _
    $region6: #{tpu_custom_call.1} parent=1 // loop_footer
      %s20 = sadd.s32 1, %s16
    $region7: #{tpu_custom_call.1} parent=1 // loop_footer_branch
      %15 = sbr.rel target = $region3
    $region8: #{tpu_custom_call.1} parent=1 // loop_exit
      _
    %1168 = vsyncpa [#allocation3], 1
    %s1169 = scalar_lea.sflag [#allocation3], 1
    %1170 = vsyncpa %s1169, 1

</llo_original>
